<compile_context>
chip_gen: v6e
topology: v6e:2x2x1
jax: 0.10.0
libtpu: 0.0.40
codegen_flags: <defaults>
</compile_context>

<pallas_src>
import functools

import jax
import jax.numpy as jnp
from jax import lax
from jax.experimental import pallas as pl
from jax.experimental.pallas import tpu as pltpu


def _round_up(x, m):
    return (x + m - 1) // m * m


def dqn_kernel(x_ref, w1_ref, b1_ref, w2_ref, b2_ref, w3_ref, b3_ref, out_ref):
    """Feature-major fused MLP: every activation keeps batch on the 128-lane axis.

    x_ref  : (TB, S)     f32   batch tile (batch on sublanes here only)
    w*_ref : (out, in)   MXU dtype, PyTorch layout, VMEM-resident across tiles
    b*_ref : (out, 1)    f32, broadcast over lanes
    out_ref: (A_pad, TB) f32, lane-dense store (TB is a multiple of 128)
    """
    cdt = w1_ref.dtype

    # fc1: contract the state dim of both operands -> (H, TB); batch lands on lanes.
    x = x_ref[...].astype(cdt)  # in-kernel cast: rides the VPU, no extra XLA pass
    h1 = lax.dot_general(w1_ref[...], x, (((1,), (1,)), ((), ())),
                         preferred_element_type=jnp.float32)
    h1 = jnp.maximum(h1 + b1_ref[...], 0.0)

    # fc2: (H, H) @ (H, TB) -> (H, TB)
    h2 = jnp.dot(w2_ref[...], h1.astype(cdt), preferred_element_type=jnp.float32)
    h2 = jnp.maximum(h2 + b2_ref[...], 0.0)

    # fc3: (A_pad, H) @ (H, TB) -> (A_pad, TB), f32 accumulation + bias
    out_ref[...] = (
        jnp.dot(w3_ref[...], h2.astype(cdt), preferred_element_type=jnp.float32)
        + b3_ref[...]
    ).astype(out_ref.dtype)


def prepare_params(params, matmul_dtype=jnp.bfloat16):
    """One-time parameter prep (NOT in the per-call hot path).

    Keeps PyTorch (out, in) weight layout, casts weights to the MXU operand dtype,
    reshapes biases to (out, 1) f32, and pads fc3's out-dim to a sublane multiple of 8.
    """
    w1, b1, w2, b2, w3, b3 = params
    a = w3.shape[0]
    a_pad = _round_up(a, 8)
    w3p = jnp.pad(w3, ((0, a_pad - a), (0, 0)))
    b3p = jnp.pad(b3, ((0, a_pad - a),))

    def prep(w, b):
        return w.astype(matmul_dtype), b.astype(jnp.float32).reshape(-1, 1)

    w1c, b1c = prep(w1, b1)
    w2c, b2c = prep(w2, b2)
    w3c, b3c = prep(w3p, b3p)
    return (w1c, b1c, w2c, b2c, w3c, b3c)


@functools.partial(jax.jit, static_argnames=("action_size", "block_b"))
def dqn_forward(x, prepped, *, action_size, block_b=512):
    """Fused DQN forward.  x: (B, state_size) f32.  Returns (B, action_size) f32."""
    w1, b1, w2, b2, w3, b3 = prepped
    B, S = x.shape
    H = w1.shape[0]
    A_pad = w3.shape[0]

    # --- batch tiling: batch lives on the lane axis of every activation --------------
    # TB is a multiple of 128 (lane-dense output store); >= 2 grid steps when the batch
    # allows it so the "parallel" axis can be megacore-split across v7x's two TCs.
    B_pad128 = _round_up(B, 128)
    chunks = B_pad128 // 128
    max_chunks_per_step = max(1, block_b // 128)
    steps = max(pl.cdiv(chunks, max_chunks_per_step), min(chunks, 2))
    TB = 128 * pl.cdiv(chunks, steps)
    B_pad = _round_up(B, TB)
    grid = (B_pad // TB,)

    xp = x if B_pad == B else jnp.pad(x, ((0, B_pad - B), (0, 0)))

    def resident(a):  # weights/biases stay put across batch tiles
        return pl.BlockSpec(a.shape, lambda i: (0,) * a.ndim)

    flops = 2 * B_pad * (S * H + H * H + H * A_pad)
    bytes_accessed = (
        xp.size * xp.dtype.itemsize
        + sum(a.size * a.dtype.itemsize for a in (w1, b1, w2, b2, w3, b3))
        + A_pad * B_pad * 4
    )

    out_t = pl.pallas_call(
        dqn_kernel,
        out_shape=jax.ShapeDtypeStruct((A_pad, B_pad), jnp.float32),
        grid=grid,
        in_specs=[
            pl.BlockSpec((TB, S), lambda i: (i, 0)),   # x: tiled over batch
            resident(w1), resident(b1),
            resident(w2), resident(b2),
            resident(w3), resident(b3),
        ],
        out_specs=pl.BlockSpec((A_pad, TB), lambda i: (0, i)),  # batch on lanes
        compiler_params=pltpu.CompilerParams(
            dimension_semantics=("parallel",),
        ),
        cost_estimate=pl.CostEstimate(
            flops=flops, transcendentals=0, bytes_accessed=bytes_accessed
        ),
    )(xp, w1, b1, w2, b2, w3, b3)

    # Tiny (<= 8-sublane) slab -> (B, A) view; padded rows/cols are sliced off.
    return out_t[:action_size, :B].T


def init_dqn_params(key, state_size, action_size, hidden=256):
    """PyTorch nn.Linear-style init: weight (out, in), bias (out,), uniform +/- 1/sqrt(fan_in)."""
    def linear(k, fan_in, fan_out):
        kw, kb = jax.random.split(k)
        bound = float(fan_in) ** -0.5
        w = jax.random.uniform(kw, (fan_out, fan_in), jnp.float32, -bound, bound)
        b = jax.random.uniform(kb, (fan_out,), jnp.float32, -bound, bound)
        return w, b

    k1, k2, k3 = jax.random.split(key, 3)
    w1, b1 = linear(k1, state_size, hidden)
    w2, b2 = linear(k2, hidden, hidden)
    w3, b3 = linear(k3, hidden, action_size)
    return (w1, b1, w2, b2, w3, b3)


def dqn_reference(x, params):
    w1, b1, w2, b2, w3, b3 = params
    h1 = jax.nn.relu(x @ w1.T + b1)
    h2 = jax.nn.relu(h1 @ w2.T + b2)
    return h2 @ w3.T + b3


if __name__ == "__main__":
    state_size = 8
    action_size = 4
    batch = 8

    key = jax.random.PRNGKey(0)
    kx, kp = jax.random.split(key)
    x = jax.random.normal(kx, (batch, state_size), jnp.float32)
    params = init_dqn_params(kp, state_size, action_size)

    ref = dqn_reference(x, params)

    # 1) f32 MXU-operand path: exact check of layout / padding / tiling / bias handling.
    prepped_f32 = prepare_params(params, matmul_dtype=jnp.float32)
    out_f32 = dqn_forward(x, prepped_f32, action_size=action_size)
    jax.block_until_ready(out_f32)
    assert out_f32.shape == (batch, action_size)
    assert jnp.allclose(out_f32, ref, atol=1e-4, rtol=1e-4)

    # 2) bf16 MXU-operand path (default): looser tolerance.
    prepped_bf16 = prepare_params(params)
    out_bf16 = dqn_forward(x, prepped_bf16, action_size=action_size)
    jax.block_until_ready(out_bf16)
    assert out_bf16.shape == (batch, action_size)
    assert jnp.allclose(out_bf16, ref, atol=5e-2, rtol=5e-2)

    # 3) Larger non-multiple batch: exercises batch padding and a >= 2-step grid.
    xb = jax.random.normal(kx, (300, state_size), jnp.float32)
    out_big = dqn_forward(xb, prepped_f32, action_size=action_size, block_b=512)
    jax.block_until_ready(out_big)
    assert out_big.shape == (300, action_size)
    assert jnp.allclose(out_big, dqn_reference(xb, params), atol=1e-4, rtol=1e-4)

    print("KERNEL_OK")
</pallas_src>

<mosaic_0001>
module attributes {stable_mosaic.version = 11 : i64} {
  func.func @dqn_kernel(%arg0: i32, %arg1: memref<128x8xf32, #tpu.memory_space<vmem>>, %arg2: memref<256x8xf32, #tpu.memory_space<vmem>>, %arg3: memref<256x1xf32, #tpu.memory_space<vmem>>, %arg4: memref<256x256xf32, #tpu.memory_space<vmem>>, %arg5: memref<256x1xf32, #tpu.memory_space<vmem>>, %arg6: memref<8x256xf32, #tpu.memory_space<vmem>>, %arg7: memref<8x1xf32, #tpu.memory_space<vmem>>, %arg8: memref<8x128xf32, #tpu.memory_space<vmem>>) attributes {dimension_semantics = [#tpu.dimension_semantics<parallel>], iteration_bounds = array<i64: 1>, scalar_prefetch = 0 : i64, scratch_operands = 0 : i64, tpu.core_type = #tpu.core_type<tc>, window_params = [{transform_indices = @transform_0, window_bounds = array<i64: 128, 8>}, {pipeline_mode = #tpu.pipeline_mode<synchronous>, transform_indices = @transform_1, window_bounds = array<i64: 256, 8>}, {pipeline_mode = #tpu.pipeline_mode<synchronous>, transform_indices = @transform_2, window_bounds = array<i64: 256, 1>}, {pipeline_mode = #tpu.pipeline_mode<synchronous>, transform_indices = @transform_3, window_bounds = array<i64: 256, 256>}, {pipeline_mode = #tpu.pipeline_mode<synchronous>, transform_indices = @transform_4, window_bounds = array<i64: 256, 1>}, {pipeline_mode = #tpu.pipeline_mode<synchronous>, transform_indices = @transform_5, window_bounds = array<i64: 8, 256>}, {pipeline_mode = #tpu.pipeline_mode<synchronous>, transform_indices = @transform_6, window_bounds = array<i64: 8, 1>}, {transform_indices = @transform_7, window_bounds = array<i64: 8, 128>}]} {
    %c0 = arith.constant 0 : index
    %c0_0 = arith.constant 0 : index
    %0 = vector.load %arg1[%c0, %c0_0] : memref<128x8xf32, #tpu.memory_space<vmem>>, vector<128x8xf32>
    %c0_1 = arith.constant 0 : index
    %c0_2 = arith.constant 0 : index
    %1 = vector.load %arg2[%c0_1, %c0_2] : memref<256x8xf32, #tpu.memory_space<vmem>>, vector<256x8xf32>
    %cst = arith.constant dense<0.000000e+00> : vector<256x128xf32>
    %2 = tpu.matmul %1, %0, %cst {dimension_numbers = #tpu.dot_dimension_numbers<[1], [1], [0], [0], [0, 0, 1, 0], [], []>} : vector<256x8xf32>, vector<128x8xf32>, vector<256x128xf32> -> vector<256x128xf32>
    %c0_3 = arith.constant 0 : index
    %c0_4 = arith.constant 0 : index
    %3 = vector.load %arg3[%c0_3, %c0_4] : memref<256x1xf32, #tpu.memory_space<vmem>>, vector<256x1xf32>
    %4 = vector.broadcast %3 : vector<256x1xf32> to vector<256x128xf32>
    %5 = arith.addf %2, %4 : vector<256x128xf32>
    %cst_5 = arith.constant 0.000000e+00 : f32
    %6 = vector.broadcast %cst_5 : f32 to vector<256x128xf32>
    %7 = arith.maximumf %5, %6 : vector<256x128xf32>
    %c0_6 = arith.constant 0 : index
    %c0_7 = arith.constant 0 : index
    %8 = vector.load %arg4[%c0_6, %c0_7] : memref<256x256xf32, #tpu.memory_space<vmem>>, vector<256x256xf32>
    %cst_8 = arith.constant dense<0.000000e+00> : vector<256x128xf32>
    %9 = tpu.matmul %8, %7, %cst_8 {dimension_numbers = #tpu.dot_dimension_numbers<[1], [0], [0], [1], [0, 0, 1, 1], [], []>} : vector<256x256xf32>, vector<256x128xf32>, vector<256x128xf32> -> vector<256x128xf32>
    %c0_9 = arith.constant 0 : index
    %c0_10 = arith.constant 0 : index
    %10 = vector.load %arg5[%c0_9, %c0_10] : memref<256x1xf32, #tpu.memory_space<vmem>>, vector<256x1xf32>
    %11 = vector.broadcast %10 : vector<256x1xf32> to vector<256x128xf32>
    %12 = arith.addf %9, %11 : vector<256x128xf32>
    %cst_11 = arith.constant 0.000000e+00 : f32
    %13 = vector.broadcast %cst_11 : f32 to vector<256x128xf32>
    %14 = arith.maximumf %12, %13 : vector<256x128xf32>
    %c0_12 = arith.constant 0 : index
    %c0_13 = arith.constant 0 : index
    %15 = vector.load %arg6[%c0_12, %c0_13] : memref<8x256xf32, #tpu.memory_space<vmem>>, vector<8x256xf32>
    %cst_14 = arith.constant dense<0.000000e+00> : vector<8x128xf32>
    %16 = tpu.matmul %15, %14, %cst_14 {dimension_numbers = #tpu.dot_dimension_numbers<[1], [0], [0], [1], [0, 0, 1, 1], [], []>} : vector<8x256xf32>, vector<256x128xf32>, vector<8x128xf32> -> vector<8x128xf32>
    %c0_15 = arith.constant 0 : index
    %c0_16 = arith.constant 0 : index
    %17 = vector.load %arg7[%c0_15, %c0_16] : memref<8x1xf32, #tpu.memory_space<vmem>>, vector<8x1xf32>
    %18 = vector.broadcast %17 : vector<8x1xf32> to vector<8x128xf32>
    %19 = arith.addf %16, %18 : vector<8x128xf32>
    %c0_17 = arith.constant 0 : index
    %c0_18 = arith.constant 0 : index
    %20 = vector.load %arg8[%c0_17, %c0_18] : memref<8x128xf32, #tpu.memory_space<vmem>>, vector<8x128xf32>
    tpu.vector_store %arg8[%c0_17, %c0_18], %19 {strides = array<i32>} : memref<8x128xf32, #tpu.memory_space<vmem>>, vector<8x128xf32>,
    return
  }
  func.func @transform_0(%arg0: i32) -> (i32, i32) {
    %c0_i32 = arith.constant 0 : i32
    %c0_i32_0 = arith.constant 0 : i32
    return %arg0, %c0_i32 : i32, i32
  }
  func.func @transform_1(%arg0: i32) -> (i32, i32) {
    %c0_i32 = arith.constant 0 : i32
    %c0_i32_0 = arith.constant 0 : i32
    %c0_i32_1 = arith.constant 0 : i32
    return %c0_i32, %c0_i32_0 : i32, i32
  }
  func.func @transform_2(%arg0: i32) -> (i32, i32) {
    %c0_i32 = arith.constant 0 : i32
    %c0_i32_0 = arith.constant 0 : i32
    %c0_i32_1 = arith.constant 0 : i32
    return %c0_i32, %c0_i32_0 : i32, i32
  }
  func.func @transform_3(%arg0: i32) -> (i32, i32) {
    %c0_i32 = arith.constant 0 : i32
    %c0_i32_0 = arith.constant 0 : i32
    %c0_i32_1 = arith.constant 0 : i32
    return %c0_i32, %c0_i32_0 : i32, i32
  }
  func.func @transform_4(%arg0: i32) -> (i32, i32) {
    %c0_i32 = arith.constant 0 : i32
    %c0_i32_0 = arith.constant 0 : i32
    %c0_i32_1 = arith.constant 0 : i32
    return %c0_i32, %c0_i32_0 : i32, i32
  }
  func.func @transform_5(%arg0: i32) -> (i32, i32) {
    %c0_i32 = arith.constant 0 : i32
    %c0_i32_0 = arith.constant 0 : i32
    %c0_i32_1 = arith.constant 0 : i32
    return %c0_i32, %c0_i32_0 : i32, i32
  }
  func.func @transform_6(%arg0: i32) -> (i32, i32) {
    %c0_i32 = arith.constant 0 : i32
    %c0_i32_0 = arith.constant 0 : i32
    %c0_i32_1 = arith.constant 0 : i32
    return %c0_i32, %c0_i32_0 : i32, i32
  }
  func.func @transform_7(%arg0: i32) -> (i32, i32) {
    %c0_i32 = arith.constant 0 : i32
    %c0_i32_0 = arith.constant 0 : i32
    return %c0_i32, %arg0 : i32, i32
  }
}

</mosaic_0001>

<llo_original>
// kernel: dqn_forward.1
$region0: #{dqn_forward.1}
  #allocation0 [shape = 'u32[]', space=smem, size = 0x4, offset = 0x4, fixed_abs, tag = 'smem constant byte address 0x4 - core index']
  #allocation1 [shape = 'u32[144,128]{1,0:T(1,128)}', space=vmem, size = 0x12000, scoped, tag = 'internal scratch']
  %s0 = inlined_call_operand.vmem [shape: f32[128,8], index: 0, kind: input, shape index: {}]
  %s1 = inlined_call_operand.vmem [shape: f32[256,8], index: 1, kind: input, shape index: {}]
  %s2 = inlined_call_operand.vmem [shape: f32[256,1], index: 2, kind: input, shape index: {}]
  %s3 = inlined_call_operand.vmem [shape: f32[256,256], index: 3, kind: input, shape index: {}]
  %s4 = inlined_call_operand.vmem [shape: f32[256,1], index: 4, kind: input, shape index: {}]
  %s5 = inlined_call_operand.vmem [shape: f32[8,256], index: 5, kind: input, shape index: {}]
  %s6 = inlined_call_operand.vmem [shape: f32[8,1], index: 6, kind: input, shape index: {}]
  %s7 = inlined_call_operand.vmem [shape: f32[8,128], index: 7, kind: output, shape index: {}]
  %s8 = sld [smem:[#allocation0]]
  $region38: #{dqn_forward.1} parent=0
    _
  %s10 = ssub.s32 1, %s8
  %s11 = scalar_select 0, %s10, %s8
  // Predicated region
  $region2: #{dqn_forward.1} parent=0 // pred_check
    _
  $region3: #{dqn_forward.1} parent=0 // pred_check_branch
    %13 = sbr.rel (0) target = $region5
  $region4: #{dqn_forward.1} parent=0 // pred_region
    _
  $region5: #{dqn_forward.1} parent=0 // pred_fallthru
    _
  // Predicated region
  $region6: #{dqn_forward.1} parent=0 // pred_check
    _
  $region7: #{dqn_forward.1} parent=0 // pred_check_branch
    %15 = sbr.rel (0) target = $region9
  $region8: #{dqn_forward.1} parent=0 // pred_region
    _
  $region9: #{dqn_forward.1} parent=0 // pred_fallthru
    _
  // Predicated region
  $region10: #{dqn_forward.1} parent=0 // pred_check
    _
  $region11: #{dqn_forward.1} parent=0 // pred_check_branch
    %17 = sbr.rel (0) target = $region13
  $region12: #{dqn_forward.1} parent=0 // pred_region
    _
  $region13: #{dqn_forward.1} parent=0 // pred_fallthru
    _
  // Predicated region
  $region14: #{dqn_forward.1} parent=0 // pred_check
    _
  $region15: #{dqn_forward.1} parent=0 // pred_check_branch
    %19 = sbr.rel (0) target = $region17
  $region16: #{dqn_forward.1} parent=0 // pred_region
    _
  $region17: #{dqn_forward.1} parent=0 // pred_fallthru
    _
  // Predicated region
  $region18: #{dqn_forward.1} parent=0 // pred_check
    _
  $region19: #{dqn_forward.1} parent=0 // pred_check_branch
    %21 = sbr.rel (0) target = $region21
  $region20: #{dqn_forward.1} parent=0 // pred_region
    _
  $region21: #{dqn_forward.1} parent=0 // pred_fallthru
    _
  // Predicated region
  $region22: #{dqn_forward.1} parent=0 // pred_check
    _
  $region23: #{dqn_forward.1} parent=0 // pred_check_branch
    %23 = sbr.rel (0) target = $region25
  $region24: #{dqn_forward.1} parent=0 // pred_region
    _
  $region25: #{dqn_forward.1} parent=0 // pred_fallthru
    _
  // Predicated region
  $region26: #{dqn_forward.1} parent=0 // pred_check
    _
  $region27: #{dqn_forward.1} parent=0 // pred_check_branch
    %25 = sbr.rel (0) target = $region29
  $region28: #{dqn_forward.1} parent=0 // pred_region
    _
  $region29: #{dqn_forward.1} parent=0 // pred_fallthru
    _
  %v26 = vld [vmem:[%s0] sm:$0xff]
  %v27 = vld [vmem:[%s0 + $0x8] sm:$0xff]
  %v28 = vld [vmem:[%s0 + $0x10] sm:$0xff]
  %v29 = vld [vmem:[%s0 + $0x18] sm:$0xff]
  %v30 = vld [vmem:[%s0 + $0x20] sm:$0xff]
  %v31 = vld [vmem:[%s0 + $0x28] sm:$0xff]
  %v32 = vld [vmem:[%s0 + $0x30] sm:$0xff]
  %v33 = vld [vmem:[%s0 + $0x38] sm:$0xff]
  %v34 = vld [vmem:[%s0 + $0x40] sm:$0xff]
  %v35 = vld [vmem:[%s0 + $0x48] sm:$0xff]
  %v36 = vld [vmem:[%s0 + $0x50] sm:$0xff]
  %v37 = vld [vmem:[%s0 + $0x58] sm:$0xff]
  %v38 = vld [vmem:[%s0 + $0x60] sm:$0xff]
  %v39 = vld [vmem:[%s0 + $0x68] sm:$0xff]
  %v40 = vld [vmem:[%s0 + $0x70] sm:$0xff]
  %v41 = vld [vmem:[%s0 + $0x78] sm:$0xff]
  %v42 = vld [vmem:[%s1] sm:$0xff]
  %v43 = vld [vmem:[%s1 + $0x8] sm:$0xff]
  %v44 = vld [vmem:[%s1 + $0x10] sm:$0xff]
  %v45 = vld [vmem:[%s1 + $0x18] sm:$0xff]
  %v46 = vld [vmem:[%s1 + $0x20] sm:$0xff]
  %v47 = vld [vmem:[%s1 + $0x28] sm:$0xff]
  %v48 = vld [vmem:[%s1 + $0x30] sm:$0xff]
  %v49 = vld [vmem:[%s1 + $0x38] sm:$0xff]
  %v50 = vld [vmem:[%s1 + $0x40] sm:$0xff]
  %v51 = vld [vmem:[%s1 + $0x48] sm:$0xff]
  %v52 = vld [vmem:[%s1 + $0x50] sm:$0xff]
  %v53 = vld [vmem:[%s1 + $0x58] sm:$0xff]
  %v54 = vld [vmem:[%s1 + $0x60] sm:$0xff]
  %v55 = vld [vmem:[%s1 + $0x68] sm:$0xff]
  %v56 = vld [vmem:[%s1 + $0x70] sm:$0xff]
  %v57 = vld [vmem:[%s1 + $0x78] sm:$0xff]
  %v58 = vld [vmem:[%s1 + $0x80] sm:$0xff]
  %v59 = vld [vmem:[%s1 + $0x88] sm:$0xff]
  %v60 = vld [vmem:[%s1 + $0x90] sm:$0xff]
  %v61 = vld [vmem:[%s1 + $0x98] sm:$0xff]
  %v62 = vld [vmem:[%s1 + $0xa0] sm:$0xff]
  %v63 = vld [vmem:[%s1 + $0xa8] sm:$0xff]
  %v64 = vld [vmem:[%s1 + $0xb0] sm:$0xff]
  %v65 = vld [vmem:[%s1 + $0xb8] sm:$0xff]
  %v66 = vld [vmem:[%s1 + $0xc0] sm:$0xff]
  %v67 = vld [vmem:[%s1 + $0xc8] sm:$0xff]
  %v68 = vld [vmem:[%s1 + $0xd0] sm:$0xff]
  %v69 = vld [vmem:[%s1 + $0xd8] sm:$0xff]
  %v70 = vld [vmem:[%s1 + $0xe0] sm:$0xff]
  %v71 = vld [vmem:[%s1 + $0xe8] sm:$0xff]
  %v72 = vld [vmem:[%s1 + $0xf0] sm:$0xff]
  %v73 = vld [vmem:[%s1 + $0xf8] sm:$0xff]
  %v74 = vld [vmem:[%s2] sm:$0xff]
  %v75 = vld [vmem:[%s2 + $0x8] sm:$0xff]
  %v76 = vld [vmem:[%s2 + $0x10] sm:$0xff]
  %v77 = vld [vmem:[%s2 + $0x18] sm:$0xff]
  %v78 = vld [vmem:[%s2 + $0x20] sm:$0xff]
  %v79 = vld [vmem:[%s2 + $0x28] sm:$0xff]
  %v80 = vld [vmem:[%s2 + $0x30] sm:$0xff]
  %v81 = vld [vmem:[%s2 + $0x38] sm:$0xff]
  %v82 = vld [vmem:[%s2 + $0x40] sm:$0xff]
  %v83 = vld [vmem:[%s2 + $0x48] sm:$0xff]
  %v84 = vld [vmem:[%s2 + $0x50] sm:$0xff]
  %v85 = vld [vmem:[%s2 + $0x58] sm:$0xff]
  %v86 = vld [vmem:[%s2 + $0x60] sm:$0xff]
  %v87 = vld [vmem:[%s2 + $0x68] sm:$0xff]
  %v88 = vld [vmem:[%s2 + $0x70] sm:$0xff]
  %v89 = vld [vmem:[%s2 + $0x78] sm:$0xff]
  %v90 = vld [vmem:[%s2 + $0x80] sm:$0xff]
  %v91 = vld [vmem:[%s2 + $0x88] sm:$0xff]
  %v92 = vld [vmem:[%s2 + $0x90] sm:$0xff]
  %v93 = vld [vmem:[%s2 + $0x98] sm:$0xff]
  %v94 = vld [vmem:[%s2 + $0xa0] sm:$0xff]
  %v95 = vld [vmem:[%s2 + $0xa8] sm:$0xff]
  %v96 = vld [vmem:[%s2 + $0xb0] sm:$0xff]
  %v97 = vld [vmem:[%s2 + $0xb8] sm:$0xff]
  %v98 = vld [vmem:[%s2 + $0xc0] sm:$0xff]
  %v99 = vld [vmem:[%s2 + $0xc8] sm:$0xff]
  %v100 = vld [vmem:[%s2 + $0xd0] sm:$0xff]
  %v101 = vld [vmem:[%s2 + $0xd8] sm:$0xff]
  %v102 = vld [vmem:[%s2 + $0xe0] sm:$0xff]
  %v103 = vld [vmem:[%s2 + $0xe8] sm:$0xff]
  %v104 = vld [vmem:[%s2 + $0xf0] sm:$0xff]
  %v105 = vld [vmem:[%s2 + $0xf8] sm:$0xff]
  %107 = vset.pattern.permute.xlu0 0
  %108 = vperm.xlu0 %107, %v74
  %v109 = vpop.permute.xlu0 %108
  %112 = vset.pattern.permute.xlu0 0
  %113 = vperm.xlu0 %112, %v75
  %v114 = vpop.permute.xlu0 %113
  %117 = vset.pattern.permute.xlu0 0
  %118 = vperm.xlu0 %117, %v76
  %v119 = vpop.permute.xlu0 %118
  %122 = vset.pattern.permute.xlu0 0
  %123 = vperm.xlu0 %122, %v77
  %v124 = vpop.permute.xlu0 %123
  %127 = vset.pattern.permute.xlu0 0
  %128 = vperm.xlu0 %127, %v78
  %v129 = vpop.permute.xlu0 %128
  %132 = vset.pattern.permute.xlu0 0
  %133 = vperm.xlu0 %132, %v79
  %v134 = vpop.permute.xlu0 %133
  %137 = vset.pattern.permute.xlu0 0
  %138 = vperm.xlu0 %137, %v80
  %v139 = vpop.permute.xlu0 %138
  %142 = vset.pattern.permute.xlu0 0
  %143 = vperm.xlu0 %142, %v81
  %v144 = vpop.permute.xlu0 %143
  %147 = vset.pattern.permute.xlu0 0
  %148 = vperm.xlu0 %147, %v82
  %v149 = vpop.permute.xlu0 %148
  %152 = vset.pattern.permute.xlu0 0
  %153 = vperm.xlu0 %152, %v83
  %v154 = vpop.permute.xlu0 %153
  %157 = vset.pattern.permute.xlu0 0
  %158 = vperm.xlu0 %157, %v84
  %v159 = vpop.permute.xlu0 %158
  %162 = vset.pattern.permute.xlu0 0
  %163 = vperm.xlu0 %162, %v85
  %v164 = vpop.permute.xlu0 %163
  %167 = vset.pattern.permute.xlu0 0
  %168 = vperm.xlu0 %167, %v86
  %v169 = vpop.permute.xlu0 %168
  %172 = vset.pattern.permute.xlu0 0
  %173 = vperm.xlu0 %172, %v87
  %v174 = vpop.permute.xlu0 %173
  %177 = vset.pattern.permute.xlu0 0
  %178 = vperm.xlu0 %177, %v88
  %v179 = vpop.permute.xlu0 %178
  %182 = vset.pattern.permute.xlu0 0
  %183 = vperm.xlu0 %182, %v89
  %v184 = vpop.permute.xlu0 %183
  %187 = vset.pattern.permute.xlu0 0
  %188 = vperm.xlu0 %187, %v90
  %v189 = vpop.permute.xlu0 %188
  %192 = vset.pattern.permute.xlu0 0
  %193 = vperm.xlu0 %192, %v91
  %v194 = vpop.permute.xlu0 %193
  %197 = vset.pattern.permute.xlu0 0
  %198 = vperm.xlu0 %197, %v92
  %v199 = vpop.permute.xlu0 %198
  %202 = vset.pattern.permute.xlu0 0
  %203 = vperm.xlu0 %202, %v93
  %v204 = vpop.permute.xlu0 %203
  %207 = vset.pattern.permute.xlu0 0
  %208 = vperm.xlu0 %207, %v94
  %v209 = vpop.permute.xlu0 %208
  %212 = vset.pattern.permute.xlu0 0
  %213 = vperm.xlu0 %212, %v95
  %v214 = vpop.permute.xlu0 %213
  %217 = vset.pattern.permute.xlu0 0
  %218 = vperm.xlu0 %217, %v96
  %v219 = vpop.permute.xlu0 %218
  %222 = vset.pattern.permute.xlu0 0
  %223 = vperm.xlu0 %222, %v97
  %v224 = vpop.permute.xlu0 %223
  %227 = vset.pattern.permute.xlu0 0
  %228 = vperm.xlu0 %227, %v98
  %v229 = vpop.permute.xlu0 %228
  %232 = vset.pattern.permute.xlu0 0
  %233 = vperm.xlu0 %232, %v99
  %v234 = vpop.permute.xlu0 %233
  %237 = vset.pattern.permute.xlu0 0
  %238 = vperm.xlu0 %237, %v100
  %v239 = vpop.permute.xlu0 %238
  %242 = vset.pattern.permute.xlu0 0
  %243 = vperm.xlu0 %242, %v101
  %v244 = vpop.permute.xlu0 %243
  %247 = vset.pattern.permute.xlu0 0
  %248 = vperm.xlu0 %247, %v102
  %v249 = vpop.permute.xlu0 %248
  %252 = vset.pattern.permute.xlu0 0
  %253 = vperm.xlu0 %252, %v103
  %v254 = vpop.permute.xlu0 %253
  %257 = vset.pattern.permute.xlu0 0
  %258 = vperm.xlu0 %257, %v104
  %v259 = vpop.permute.xlu0 %258
  %262 = vset.pattern.permute.xlu0 0
  %263 = vperm.xlu0 %262, %v105
  %v264 = vpop.permute.xlu0 %263
  %vm266 = vcmask 64512
  %v268 = vsel %vm266, %v42, 0
  %v271 = vsel %vm266, %v43, 0
  %v274 = vsel %vm266, %v44, 0
  %v277 = vsel %vm266, %v45, 0
  %v280 = vsel %vm266, %v46, 0
  %v283 = vsel %vm266, %v47, 0
  %v286 = vsel %vm266, %v48, 0
  %v289 = vsel %vm266, %v49, 0
  %v292 = vsel %vm266, %v50, 0
  %v295 = vsel %vm266, %v51, 0
  %v298 = vsel %vm266, %v52, 0
  %v301 = vsel %vm266, %v53, 0
  %v304 = vsel %vm266, %v54, 0
  %v307 = vsel %vm266, %v55, 0
  %v310 = vsel %vm266, %v56, 0
  %v313 = vsel %vm266, %v57, 0
  %v316 = vsel %vm266, %v58, 0
  %v319 = vsel %vm266, %v59, 0
  %v322 = vsel %vm266, %v60, 0
  %v325 = vsel %vm266, %v61, 0
  %v328 = vsel %vm266, %v62, 0
  %v331 = vsel %vm266, %v63, 0
  %v334 = vsel %vm266, %v64, 0
  %v337 = vsel %vm266, %v65, 0
  %v340 = vsel %vm266, %v66, 0
  %v343 = vsel %vm266, %v67, 0
  %v346 = vsel %vm266, %v68, 0
  %v349 = vsel %vm266, %v69, 0
  %v352 = vsel %vm266, %v70, 0
  %v355 = vsel %vm266, %v71, 0
  %v358 = vsel %vm266, %v72, 0
  %v361 = vsel %vm266, %v73, 0
  %v364 = vsel %vm266, %v26, 0
  %v367 = vsel %vm266, %v27, 0
  %v370 = vsel %vm266, %v28, 0
  %v373 = vsel %vm266, %v29, 0
  %v376 = vsel %vm266, %v30, 0
  %v379 = vsel %vm266, %v31, 0
  %v382 = vsel %vm266, %v32, 0
  %v385 = vsel %vm266, %v33, 0
  %v388 = vsel %vm266, %v34, 0
  %v391 = vsel %vm266, %v35, 0
  %v394 = vsel %vm266, %v36, 0
  %v397 = vsel %vm266, %v37, 0
  %v400 = vsel %vm266, %v38, 0
  %v403 = vsel %vm266, %v39, 0
  %v406 = vsel %vm266, %v40, 0
  %v409 = vsel %vm266, %v41, 0
  %411 = vmatprep.subr.mxu0 0.0
  %412 = vmatpush1.xpose.msra.mxu0 %v409
  %413 = vmatprep.subr.mxu0 0.0
  %414 = vmatpush1.xpose.msra.mxu0 %v406
  %415 = vmatprep.subr.mxu0 0.0
  %416 = vmatpush1.xpose.msra.mxu0 %v403
  %417 = vmatprep.subr.mxu0 0.0
  %418 = vmatpush1.xpose.msra.mxu0 %v400
  %419 = vmatprep.subr.mxu0 0.0
  %420 = vmatpush1.xpose.msra.mxu0 %v397
  %421 = vmatprep.subr.mxu0 0.0
  %422 = vmatpush1.xpose.msra.mxu0 %v394
  %423 = vmatprep.subr.mxu0 0.0
  %424 = vmatpush1.xpose.msra.mxu0 %v391
  %425 = vmatprep.subr.mxu0 0.0
  %426 = vmatpush1.xpose.msra.mxu0 %v388
  %427 = vmatprep.subr.mxu0 0.0
  %428 = vmatpush1.xpose.msra.mxu0 %v385
  %429 = vmatprep.subr.mxu0 0.0
  %430 = vmatpush1.xpose.msra.mxu0 %v382
  %431 = vmatprep.subr.mxu0 0.0
  %432 = vmatpush1.xpose.msra.mxu0 %v379
  %433 = vmatprep.subr.mxu0 0.0
  %434 = vmatpush1.xpose.msra.mxu0 %v376
  %435 = vmatprep.subr.mxu0 0.0
  %436 = vmatpush1.xpose.msra.mxu0 %v373
  %437 = vmatprep.subr.mxu0 0.0
  %438 = vmatpush1.xpose.msra.mxu0 %v370
  %439 = vmatprep.subr.mxu0 0.0
  %440 = vmatpush1.xpose.msra.mxu0 %v367
  %441 = vmatprep.subr.mxu0 0.0
  %442 = vmatpush1.xpose.msra.mxu0 %v364
  %443 = vmatprep.subr.mxu0 0.0
  %444 = vmatpush2.xpose.msra.mxu0 0.0
  %445 = vmatprep.subr.mxu0 0.0
  %446 = vmatpush2.xpose.msra.mxu0 0.0
  %447 = vmatprep.subr.mxu0 0.0
  %448 = vmatpush2.xpose.msra.mxu0 0.0
  %449 = vmatprep.subr.mxu0 0.0
  %450 = vmatpush2.xpose.msra.mxu0 0.0
  %451 = vmatprep.subr.mxu0 0.0
  %452 = vmatpush2.xpose.msra.mxu0 0.0
  %453 = vmatprep.subr.mxu0 0.0
  %454 = vmatpush2.xpose.msra.mxu0 0.0
  %455 = vmatprep.subr.mxu0 0.0
  %456 = vmatpush2.xpose.msra.mxu0 0.0
  %457 = vmatprep.subr.mxu0 0.0
  %458 = vmatpush2.xpose.msra.mxu0 0.0
  %459 = vmatprep.subr.mxu0 0.0
  %460 = vmatpush2.xpose.msra.mxu0 0.0
  %461 = vmatprep.subr.mxu0 0.0
  %462 = vmatpush2.xpose.msra.mxu0 0.0
  %463 = vmatprep.subr.mxu0 0.0
  %464 = vmatpush2.xpose.msra.mxu0 0.0
  %465 = vmatprep.subr.mxu0 0.0
  %466 = vmatpush2.xpose.msra.mxu0 0.0
  %467 = vmatprep.subr.mxu0 0.0
  %468 = vmatpush2.xpose.msra.mxu0 0.0
  %469 = vmatprep.subr.mxu0 0.0
  %470 = vmatpush2.xpose.msra.mxu0 0.0
  %471 = vmatprep.subr.mxu0 0.0
  %472 = vmatpush2.xpose.msra.mxu0 0.0
  %473 = vmatprep.subr.mxu0 0.0
  %474 = vmatpush2.xpose.msra.mxu0 0.0
  %475 = vmatprep.mubr.f32.mxu0 0.0
  %476 = vmatmul.mubr.f32.gmra.mxu0 %v268
  %v477 = vpop.f32.mrf.mxu0
  %v478 = vadd.f32 %v109, %v477
  %v479 = vpop.f32.mrf.mxu0
  %480 = vmatprep.mubr.f32.mxu0 0.0
  %481 = vmatmul.mubr.f32.gmra.mxu0 %v271
  %v482 = vpop.f32.mrf.mxu0
  %v483 = vadd.f32 %v114, %v482
  %v484 = vpop.f32.mrf.mxu0
  %485 = vmatprep.mubr.f32.mxu0 0.0
  %486 = vmatmul.mubr.f32.gmra.mxu0 %v274
  %v487 = vpop.f32.mrf.mxu0
  %v488 = vadd.f32 %v119, %v487
  %v489 = vpop.f32.mrf.mxu0
  %490 = vmatprep.mubr.f32.mxu0 0.0
  %491 = vmatmul.mubr.f32.gmra.mxu0 %v277
  %v492 = vpop.f32.mrf.mxu0
  %v493 = vadd.f32 %v124, %v492
  %v494 = vpop.f32.mrf.mxu0
  %495 = vmatprep.mubr.f32.mxu0 0.0
  %496 = vmatmul.mubr.f32.gmra.mxu0 %v280
  %v497 = vpop.f32.mrf.mxu0
  %v498 = vadd.f32 %v129, %v497
  %v499 = vpop.f32.mrf.mxu0
  %500 = vmatprep.mubr.f32.mxu0 0.0
  %501 = vmatmul.mubr.f32.gmra.mxu0 %v283
  %v502 = vpop.f32.mrf.mxu0
  %v503 = vadd.f32 %v134, %v502
  %v504 = vpop.f32.mrf.mxu0
  %505 = vmatprep.mubr.f32.mxu0 0.0
  %506 = vmatmul.mubr.f32.gmra.mxu0 %v286
  %v507 = vpop.f32.mrf.mxu0
  %v508 = vadd.f32 %v139, %v507
  %v509 = vpop.f32.mrf.mxu0
  %510 = vmatprep.mubr.f32.mxu0 0.0
  %511 = vmatmul.mubr.f32.gmra.mxu0 %v289
  %v512 = vpop.f32.mrf.mxu0
  %v513 = vadd.f32 %v144, %v512
  %v514 = vpop.f32.mrf.mxu0
  %515 = vmatprep.mubr.f32.mxu0 0.0
  %516 = vmatmul.mubr.f32.gmra.mxu0 %v292
  %v517 = vpop.f32.mrf.mxu0
  %v518 = vadd.f32 %v149, %v517
  %v519 = vpop.f32.mrf.mxu0
  %520 = vmatprep.mubr.f32.mxu0 0.0
  %521 = vmatmul.mubr.f32.gmra.mxu0 %v295
  %v522 = vpop.f32.mrf.mxu0
  %v523 = vadd.f32 %v154, %v522
  %v524 = vpop.f32.mrf.mxu0
  %525 = vmatprep.mubr.f32.mxu0 0.0
  %526 = vmatmul.mubr.f32.gmra.mxu0 %v298
  %v527 = vpop.f32.mrf.mxu0
  %v528 = vadd.f32 %v159, %v527
  %v529 = vpop.f32.mrf.mxu0
  %530 = vmatprep.mubr.f32.mxu0 0.0
  %531 = vmatmul.mubr.f32.gmra.mxu0 %v301
  %v532 = vpop.f32.mrf.mxu0
  %v533 = vadd.f32 %v164, %v532
  %v534 = vpop.f32.mrf.mxu0
  %535 = vmatprep.mubr.f32.mxu0 0.0
  %536 = vmatmul.mubr.f32.gmra.mxu0 %v304
  %v537 = vpop.f32.mrf.mxu0
  %v538 = vadd.f32 %v169, %v537
  %v539 = vpop.f32.mrf.mxu0
  %540 = vmatprep.mubr.f32.mxu0 0.0
  %541 = vmatmul.mubr.f32.gmra.mxu0 %v307
  %v542 = vpop.f32.mrf.mxu0
  %v543 = vadd.f32 %v174, %v542
  %v544 = vpop.f32.mrf.mxu0
  %545 = vmatprep.mubr.f32.mxu0 0.0
  %546 = vmatmul.mubr.f32.gmra.mxu0 %v310
  %v547 = vpop.f32.mrf.mxu0
  %v548 = vadd.f32 %v179, %v547
  %v549 = vpop.f32.mrf.mxu0
  %550 = vmatprep.mubr.f32.mxu0 0.0
  %551 = vmatmul.mubr.f32.gmra.mxu0 %v313
  %v552 = vpop.f32.mrf.mxu0
  %v553 = vadd.f32 %v184, %v552
  %v554 = vpop.f32.mrf.mxu0
  %555 = vmatprep.mubr.f32.mxu0 0.0
  %556 = vmatmul.mubr.f32.gmra.mxu0 %v316
  %v557 = vpop.f32.mrf.mxu0
  %v558 = vadd.f32 %v189, %v557
  %v559 = vpop.f32.mrf.mxu0
  %560 = vmatprep.mubr.f32.mxu0 0.0
  %561 = vmatmul.mubr.f32.gmra.mxu0 %v319
  %v562 = vpop.f32.mrf.mxu0
  %v563 = vadd.f32 %v194, %v562
  %v564 = vpop.f32.mrf.mxu0
  %565 = vmatprep.mubr.f32.mxu0 0.0
  %566 = vmatmul.mubr.f32.gmra.mxu0 %v322
  %v567 = vpop.f32.mrf.mxu0
  %v568 = vadd.f32 %v199, %v567
  %v569 = vpop.f32.mrf.mxu0
  %570 = vmatprep.mubr.f32.mxu0 0.0
  %571 = vmatmul.mubr.f32.gmra.mxu0 %v325
  %v572 = vpop.f32.mrf.mxu0
  %v573 = vadd.f32 %v204, %v572
  %v574 = vpop.f32.mrf.mxu0
  %575 = vmatprep.mubr.f32.mxu0 0.0
  %576 = vmatmul.mubr.f32.gmra.mxu0 %v328
  %v577 = vpop.f32.mrf.mxu0
  %v578 = vadd.f32 %v209, %v577
  %v579 = vpop.f32.mrf.mxu0
  %580 = vmatprep.mubr.f32.mxu0 0.0
  %581 = vmatmul.mubr.f32.gmra.mxu0 %v331
  %v582 = vpop.f32.mrf.mxu0
  %v583 = vadd.f32 %v214, %v582
  %v584 = vpop.f32.mrf.mxu0
  %585 = vmatprep.mubr.f32.mxu0 0.0
  %586 = vmatmul.mubr.f32.gmra.mxu0 %v334
  %v587 = vpop.f32.mrf.mxu0
  %v588 = vadd.f32 %v219, %v587
  %v589 = vpop.f32.mrf.mxu0
  %590 = vmatprep.mubr.f32.mxu0 0.0
  %591 = vmatmul.mubr.f32.gmra.mxu0 %v337
  %v592 = vpop.f32.mrf.mxu0
  %v593 = vadd.f32 %v224, %v592
  %v594 = vpop.f32.mrf.mxu0
  %595 = vmatprep.mubr.f32.mxu0 0.0
  %596 = vmatmul.mubr.f32.gmra.mxu0 %v340
  %v597 = vpop.f32.mrf.mxu0
  %v598 = vadd.f32 %v229, %v597
  %v599 = vpop.f32.mrf.mxu0
  %600 = vmatprep.mubr.f32.mxu0 0.0
  %601 = vmatmul.mubr.f32.gmra.mxu0 %v343
  %v602 = vpop.f32.mrf.mxu0
  %v603 = vadd.f32 %v234, %v602
  %v604 = vpop.f32.mrf.mxu0
  %605 = vmatprep.mubr.f32.mxu0 0.0
  %606 = vmatmul.mubr.f32.gmra.mxu0 %v346
  %v607 = vpop.f32.mrf.mxu0
  %v608 = vadd.f32 %v239, %v607
  %v609 = vpop.f32.mrf.mxu0
  %610 = vmatprep.mubr.f32.mxu0 0.0
  %611 = vmatmul.mubr.f32.gmra.mxu0 %v349
  %v612 = vpop.f32.mrf.mxu0
  %v613 = vadd.f32 %v244, %v612
  %v614 = vpop.f32.mrf.mxu0
  %615 = vmatprep.mubr.f32.mxu0 0.0
  %616 = vmatmul.mubr.f32.gmra.mxu0 %v352
  %v617 = vpop.f32.mrf.mxu0
  %v618 = vadd.f32 %v249, %v617
  %v619 = vpop.f32.mrf.mxu0
  %620 = vmatprep.mubr.f32.mxu0 0.0
  %621 = vmatmul.mubr.f32.gmra.mxu0 %v355
  %v622 = vpop.f32.mrf.mxu0
  %v623 = vadd.f32 %v254, %v622
  %v624 = vpop.f32.mrf.mxu0
  %625 = vmatprep.mubr.f32.mxu0 0.0
  %626 = vmatmul.mubr.f32.gmra.mxu0 %v358
  %v627 = vpop.f32.mrf.mxu0
  %v628 = vadd.f32 %v259, %v627
  %v629 = vpop.f32.mrf.mxu0
  %630 = vmatprep.mubr.f32.mxu0 0.0
  %631 = vmatmul.mubr.f32.gmra.mxu0 %v361
  %v632 = vpop.f32.mrf.mxu0
  %v633 = vadd.f32 %v264, %v632
  %v634 = vpop.f32.mrf.mxu0
  %635 = vdwg.mxu0
  %v636 = vmax.f32 %v478, 0.0
  %v637 = vmax.f32 %v483, 0.0
  %v638 = vmax.f32 %v488, 0.0
  %v639 = vmax.f32 %v493, 0.0
  %v640 = vmax.f32 %v498, 0.0
  %v641 = vmax.f32 %v503, 0.0
  %v642 = vmax.f32 %v508, 0.0
  %v643 = vmax.f32 %v513, 0.0
  %v644 = vmax.f32 %v518, 0.0
  %v645 = vmax.f32 %v523, 0.0
  %v646 = vmax.f32 %v528, 0.0
  %v647 = vmax.f32 %v533, 0.0
  %v648 = vmax.f32 %v538, 0.0
  %v649 = vmax.f32 %v543, 0.0
  %v650 = vmax.f32 %v548, 0.0
  %v651 = vmax.f32 %v553, 0.0
  %v652 = vmax.f32 %v558, 0.0
  %v653 = vmax.f32 %v563, 0.0
  %v654 = vmax.f32 %v568, 0.0
  %v655 = vmax.f32 %v573, 0.0
  %v656 = vmax.f32 %v578, 0.0
  %v657 = vmax.f32 %v583, 0.0
  %v658 = vmax.f32 %v588, 0.0
  %v659 = vmax.f32 %v593, 0.0
  %v660 = vmax.f32 %v598, 0.0
  %v661 = vmax.f32 %v603, 0.0
  %v662 = vmax.f32 %v608, 0.0
  %v663 = vmax.f32 %v613, 0.0
  %v664 = vmax.f32 %v618, 0.0
  %v665 = vmax.f32 %v623, 0.0
  %v666 = vmax.f32 %v628, 0.0
  %v667 = vmax.f32 %v633, 0.0
  %v668 = vld [vmem:[%s3] sm:$0xff]
  %v669 = vld [vmem:[%s3 + $0x8] sm:$0xff]
  %v670 = vld [vmem:[%s3 + $0x10] sm:$0xff]
  %v671 = vld [vmem:[%s3 + $0x18] sm:$0xff]
  %v672 = vld [vmem:[%s3 + $0x20] sm:$0xff]
  %v673 = vld [vmem:[%s3 + $0x28] sm:$0xff]
  %v674 = vld [vmem:[%s3 + $0x30] sm:$0xff]
  %v675 = vld [vmem:[%s3 + $0x38] sm:$0xff]
  %v676 = vld [vmem:[%s3 + $0x40] sm:$0xff]
  %v677 = vld [vmem:[%s3 + $0x48] sm:$0xff]
  %v678 = vld [vmem:[%s3 + $0x50] sm:$0xff]
  %v679 = vld [vmem:[%s3 + $0x58] sm:$0xff]
  %v680 = vld [vmem:[%s3 + $0x60] sm:$0xff]
  %v681 = vld [vmem:[%s3 + $0x68] sm:$0xff]
  %v682 = vld [vmem:[%s3 + $0x70] sm:$0xff]
  %v683 = vld [vmem:[%s3 + $0x78] sm:$0xff]
  %v684 = vld [vmem:[%s3 + $0x80] sm:$0xff]
  %v685 = vld [vmem:[%s3 + $0x88] sm:$0xff]
  %v686 = vld [vmem:[%s3 + $0x90] sm:$0xff]
  %v687 = vld [vmem:[%s3 + $0x98] sm:$0xff]
  %v688 = vld [vmem:[%s3 + $0xa0] sm:$0xff]
  %v689 = vld [vmem:[%s3 + $0xa8] sm:$0xff]
  %v690 = vld [vmem:[%s3 + $0xb0] sm:$0xff]
  %v691 = vld [vmem:[%s3 + $0xb8] sm:$0xff]
  %v692 = vld [vmem:[%s3 + $0xc0] sm:$0xff]
  %v693 = vld [vmem:[%s3 + $0xc8] sm:$0xff]
  %v694 = vld [vmem:[%s3 + $0xd0] sm:$0xff]
  %v695 = vld [vmem:[%s3 + $0xd8] sm:$0xff]
  %v696 = vld [vmem:[%s3 + $0xe0] sm:$0xff]
  %v697 = vld [vmem:[%s3 + $0xe8] sm:$0xff]
  %v698 = vld [vmem:[%s3 + $0xf0] sm:$0xff]
  %v699 = vld [vmem:[%s3 + $0xf8] sm:$0xff]
  %v700 = vld [vmem:[%s3 + $0x100] sm:$0xff]
  %v701 = vld [vmem:[%s3 + $0x108] sm:$0xff]
  %v702 = vld [vmem:[%s3 + $0x110] sm:$0xff]
  %v703 = vld [vmem:[%s3 + $0x118] sm:$0xff]
  %v704 = vld [vmem:[%s3 + $0x120] sm:$0xff]
  %v705 = vld [vmem:[%s3 + $0x128] sm:$0xff]
  %v706 = vld [vmem:[%s3 + $0x130] sm:$0xff]
  %v707 = vld [vmem:[%s3 + $0x138] sm:$0xff]
  %v708 = vld [vmem:[%s3 + $0x140] sm:$0xff]
  %v709 = vld [vmem:[%s3 + $0x148] sm:$0xff]
  %v710 = vld [vmem:[%s3 + $0x150] sm:$0xff]
  %v711 = vld [vmem:[%s3 + $0x158] sm:$0xff]
  %v712 = vld [vmem:[%s3 + $0x160] sm:$0xff]
  %v713 = vld [vmem:[%s3 + $0x168] sm:$0xff]
  %v714 = vld [vmem:[%s3 + $0x170] sm:$0xff]
  %v715 = vld [vmem:[%s3 + $0x178] sm:$0xff]
  %v716 = vld [vmem:[%s3 + $0x180] sm:$0xff]
  %v717 = vld [vmem:[%s3 + $0x188] sm:$0xff]
  %v718 = vld [vmem:[%s3 + $0x190] sm:$0xff]
  %v719 = vld [vmem:[%s3 + $0x198] sm:$0xff]
  %v720 = vld [vmem:[%s3 + $0x1a0] sm:$0xff]
  %v721 = vld [vmem:[%s3 + $0x1a8] sm:$0xff]
  %v722 = vld [vmem:[%s3 + $0x1b0] sm:$0xff]
  %v723 = vld [vmem:[%s3 + $0x1b8] sm:$0xff]
  %v724 = vld [vmem:[%s3 + $0x1c0] sm:$0xff]
  %v725 = vld [vmem:[%s3 + $0x1c8] sm:$0xff]
  %v726 = vld [vmem:[%s3 + $0x1d0] sm:$0xff]
  %v727 = vld [vmem:[%s3 + $0x1d8] sm:$0xff]
  %v728 = vld [vmem:[%s3 + $0x1e0] sm:$0xff]
  %v729 = vld [vmem:[%s3 + $0x1e8] sm:$0xff]
  %v730 = vld [vmem:[%s3 + $0x1f0] sm:$0xff]
  %v731 = vld [vmem:[%s3 + $0x1f8] sm:$0xff]
  %v732 = vld [vmem:[%s4] sm:$0xff]
  %v733 = vld [vmem:[%s4 + $0x8] sm:$0xff]
  %v734 = vld [vmem:[%s4 + $0x10] sm:$0xff]
  %v735 = vld [vmem:[%s4 + $0x18] sm:$0xff]
  %v736 = vld [vmem:[%s4 + $0x20] sm:$0xff]
  %v737 = vld [vmem:[%s4 + $0x28] sm:$0xff]
  %v738 = vld [vmem:[%s4 + $0x30] sm:$0xff]
  %v739 = vld [vmem:[%s4 + $0x38] sm:$0xff]
  %v740 = vld [vmem:[%s4 + $0x40] sm:$0xff]
  %v741 = vld [vmem:[%s4 + $0x48] sm:$0xff]
  %v742 = vld [vmem:[%s4 + $0x50] sm:$0xff]
  %v743 = vld [vmem:[%s4 + $0x58] sm:$0xff]
  %v744 = vld [vmem:[%s4 + $0x60] sm:$0xff]
  %v745 = vld [vmem:[%s4 + $0x68] sm:$0xff]
  %v746 = vld [vmem:[%s4 + $0x70] sm:$0xff]
  %v747 = vld [vmem:[%s4 + $0x78] sm:$0xff]
  %v748 = vld [vmem:[%s4 + $0x80] sm:$0xff]
  %v749 = vld [vmem:[%s4 + $0x88] sm:$0xff]
  %v750 = vld [vmem:[%s4 + $0x90] sm:$0xff]
  %v751 = vld [vmem:[%s4 + $0x98] sm:$0xff]
  %v752 = vld [vmem:[%s4 + $0xa0] sm:$0xff]
  %v753 = vld [vmem:[%s4 + $0xa8] sm:$0xff]
  %v754 = vld [vmem:[%s4 + $0xb0] sm:$0xff]
  %v755 = vld [vmem:[%s4 + $0xb8] sm:$0xff]
  %v756 = vld [vmem:[%s4 + $0xc0] sm:$0xff]
  %v757 = vld [vmem:[%s4 + $0xc8] sm:$0xff]
  %v758 = vld [vmem:[%s4 + $0xd0] sm:$0xff]
  %v759 = vld [vmem:[%s4 + $0xd8] sm:$0xff]
  %v760 = vld [vmem:[%s4 + $0xe0] sm:$0xff]
  %v761 = vld [vmem:[%s4 + $0xe8] sm:$0xff]
  %v762 = vld [vmem:[%s4 + $0xf0] sm:$0xff]
  %v763 = vld [vmem:[%s4 + $0xf8] sm:$0xff]
  %765 = vset.pattern.permute.xlu0 0
  %766 = vperm.xlu0 %765, %v732
  %v767 = vpop.permute.xlu0 %766
  %770 = vset.pattern.permute.xlu0 0
  %771 = vperm.xlu0 %770, %v733
  %v772 = vpop.permute.xlu0 %771
  %775 = vset.pattern.permute.xlu0 0
  %776 = vperm.xlu0 %775, %v734
  %v777 = vpop.permute.xlu0 %776
  %780 = vset.pattern.permute.xlu0 0
  %781 = vperm.xlu0 %780, %v735
  %v782 = vpop.permute.xlu0 %781
  %785 = vset.pattern.permute.xlu0 0
  %786 = vperm.xlu0 %785, %v736
  %v787 = vpop.permute.xlu0 %786
  %790 = vset.pattern.permute.xlu0 0
  %791 = vperm.xlu0 %790, %v737
  %v792 = vpop.permute.xlu0 %791
  %795 = vset.pattern.permute.xlu0 0
  %796 = vperm.xlu0 %795, %v738
  %v797 = vpop.permute.xlu0 %796
  %800 = vset.pattern.permute.xlu0 0
  %801 = vperm.xlu0 %800, %v739
  %v802 = vpop.permute.xlu0 %801
  %805 = vset.pattern.permute.xlu0 0
  %806 = vperm.xlu0 %805, %v740
  %v807 = vpop.permute.xlu0 %806
  %810 = vset.pattern.permute.xlu0 0
  %811 = vperm.xlu0 %810, %v741
  %v812 = vpop.permute.xlu0 %811
  %815 = vset.pattern.permute.xlu0 0
  %816 = vperm.xlu0 %815, %v742
  %v817 = vpop.permute.xlu0 %816
  %820 = vset.pattern.permute.xlu0 0
  %821 = vperm.xlu0 %820, %v743
  %v822 = vpop.permute.xlu0 %821
  %825 = vset.pattern.permute.xlu0 0
  %826 = vperm.xlu0 %825, %v744
  %v827 = vpop.permute.xlu0 %826
  %830 = vset.pattern.permute.xlu0 0
  %831 = vperm.xlu0 %830, %v745
  %v832 = vpop.permute.xlu0 %831
  %835 = vset.pattern.permute.xlu0 0
  %836 = vperm.xlu0 %835, %v746
  %v837 = vpop.permute.xlu0 %836
  %840 = vset.pattern.permute.xlu0 0
  %841 = vperm.xlu0 %840, %v747
  %v842 = vpop.permute.xlu0 %841
  %845 = vset.pattern.permute.xlu0 0
  %846 = vperm.xlu0 %845, %v748
  %v847 = vpop.permute.xlu0 %846
  %850 = vset.pattern.permute.xlu0 0
  %851 = vperm.xlu0 %850, %v749
  %v852 = vpop.permute.xlu0 %851
  %855 = vset.pattern.permute.xlu0 0
  %856 = vperm.xlu0 %855, %v750
  %v857 = vpop.permute.xlu0 %856
  %860 = vset.pattern.permute.xlu0 0
  %861 = vperm.xlu0 %860, %v751
  %v862 = vpop.permute.xlu0 %861
  %865 = vset.pattern.permute.xlu0 0
  %866 = vperm.xlu0 %865, %v752
  %v867 = vpop.permute.xlu0 %866
  %870 = vset.pattern.permute.xlu0 0
  %871 = vperm.xlu0 %870, %v753
  %v872 = vpop.permute.xlu0 %871
  %875 = vset.pattern.permute.xlu0 0
  %876 = vperm.xlu0 %875, %v754
  %v877 = vpop.permute.xlu0 %876
  %880 = vset.pattern.permute.xlu0 0
  %881 = vperm.xlu0 %880, %v755
  %v882 = vpop.permute.xlu0 %881
  %885 = vset.pattern.permute.xlu0 0
  %886 = vperm.xlu0 %885, %v756
  %v887 = vpop.permute.xlu0 %886
  %890 = vset.pattern.permute.xlu0 0
  %891 = vperm.xlu0 %890, %v757
  %v892 = vpop.permute.xlu0 %891
  %895 = vset.pattern.permute.xlu0 0
  %896 = vperm.xlu0 %895, %v758
  %v897 = vpop.permute.xlu0 %896
  %900 = vset.pattern.permute.xlu0 0
  %901 = vperm.xlu0 %900, %v759
  %v902 = vpop.permute.xlu0 %901
  %905 = vset.pattern.permute.xlu0 0
  %906 = vperm.xlu0 %905, %v760
  %v907 = vpop.permute.xlu0 %906
  %910 = vset.pattern.permute.xlu0 0
  %911 = vperm.xlu0 %910, %v761
  %v912 = vpop.permute.xlu0 %911
  %915 = vset.pattern.permute.xlu0 0
  %916 = vperm.xlu0 %915, %v762
  %v917 = vpop.permute.xlu0 %916
  %920 = vset.pattern.permute.xlu0 0
  %921 = vperm.xlu0 %920, %v763
  %v922 = vpop.permute.xlu0 %921
  %924 = vmatprep.subr.mxu0 0.0
  %925 = vmatpush1.msra.mxu0 %v651
  %926 = vmatprep.subr.mxu0 0.0
  %927 = vmatpush1.msra.mxu0 %v650
  %928 = vmatprep.subr.mxu0 0.0
  %929 = vmatpush1.msra.mxu0 %v649
  %930 = vmatprep.subr.mxu0 0.0
  %931 = vmatpush1.msra.mxu0 %v648
  %932 = vmatprep.subr.mxu0 0.0
  %933 = vmatpush1.msra.mxu0 %v647
  %934 = vmatprep.subr.mxu0 0.0
  %935 = vmatpush1.msra.mxu0 %v646
  %936 = vmatprep.subr.mxu0 0.0
  %937 = vmatpush1.msra.mxu0 %v645
  %938 = vmatprep.subr.mxu0 0.0
  %939 = vmatpush1.msra.mxu0 %v644
  %940 = vmatprep.subr.mxu0 0.0
  %941 = vmatpush1.msra.mxu0 %v643
  %942 = vmatprep.subr.mxu0 0.0
  %943 = vmatpush1.msra.mxu0 %v642
  %944 = vmatprep.subr.mxu0 0.0
  %945 = vmatpush1.msra.mxu0 %v641
  %946 = vmatprep.subr.mxu0 0.0
  %947 = vmatpush1.msra.mxu0 %v640
  %948 = vmatprep.subr.mxu0 0.0
  %949 = vmatpush1.msra.mxu0 %v639
  %950 = vmatprep.subr.mxu0 0.0
  %951 = vmatpush1.msra.mxu0 %v638
  %952 = vmatprep.subr.mxu0 0.0
  %953 = vmatpush1.msra.mxu0 %v637
  %954 = vmatprep.subr.mxu0 0.0
  %955 = vmatpush1.msra.mxu0 %v636
  %956 = vmatprep.subr.mxu0 0.0
  %957 = vmatpush2.msra.mxu0 %v667
  %958 = vmatprep.subr.mxu0 0.0
  %959 = vmatpush2.msra.mxu0 %v666
  %960 = vmatprep.subr.mxu0 0.0
  %961 = vmatpush2.msra.mxu0 %v665
  %962 = vmatprep.subr.mxu0 0.0
  %963 = vmatpush2.msra.mxu0 %v664
  %964 = vmatprep.subr.mxu0 0.0
  %965 = vmatpush2.msra.mxu0 %v663
  %966 = vmatprep.subr.mxu0 0.0
  %967 = vmatpush2.msra.mxu0 %v662
  %968 = vmatprep.subr.mxu0 0.0
  %969 = vmatpush2.msra.mxu0 %v661
  %970 = vmatprep.subr.mxu0 0.0
  %971 = vmatpush2.msra.mxu0 %v660
  %972 = vmatprep.subr.mxu0 0.0
  %973 = vmatpush2.msra.mxu0 %v659
  %974 = vmatprep.subr.mxu0 0.0
  %975 = vmatpush2.msra.mxu0 %v658
  %976 = vmatprep.subr.mxu0 0.0
  %977 = vmatpush2.msra.mxu0 %v657
  %978 = vmatprep.subr.mxu0 0.0
  %979 = vmatpush2.msra.mxu0 %v656
  %980 = vmatprep.subr.mxu0 0.0
  %981 = vmatpush2.msra.mxu0 %v655
  %982 = vmatprep.subr.mxu0 0.0
  %983 = vmatpush2.msra.mxu0 %v654
  %984 = vmatprep.subr.mxu0 0.0
  %985 = vmatpush2.msra.mxu0 %v653
  %986 = vmatprep.subr.mxu0 0.0
  %987 = vmatpush2.msra.mxu0 %v652
  %988 = vmatprep.mubr.f32.mxu0 %v669
  %989 = vmatmul.mubr.f32.gmra.mxu0 %v668
  %v990 = vpop.f32.mrf.mxu0
  %v991 = vadd.f32 %v767, %v990
  %v992 = vpop.f32.mrf.mxu0
  %993 = vmatprep.mubr.f32.mxu0 %v671
  %994 = vmatmul.mubr.f32.gmra.mxu0 %v670
  %v995 = vpop.f32.mrf.mxu0
  %v996 = vadd.f32 %v772, %v995
  %v997 = vpop.f32.mrf.mxu0
  %998 = vmatprep.mubr.f32.mxu0 %v673
  %999 = vmatmul.mubr.f32.gmra.mxu0 %v672
  %v1000 = vpop.f32.mrf.mxu0
  %v1001 = vadd.f32 %v777, %v1000
  %v1002 = vpop.f32.mrf.mxu0
  %1003 = vmatprep.mubr.f32.mxu0 %v675
  %1004 = vmatmul.mubr.f32.gmra.mxu0 %v674
  %v1005 = vpop.f32.mrf.mxu0
  %v1006 = vadd.f32 %v782, %v1005
  %v1007 = vpop.f32.mrf.mxu0
  %1008 = vmatprep.mubr.f32.mxu0 %v677
  %1009 = vmatmul.mubr.f32.gmra.mxu0 %v676
  %v1010 = vpop.f32.mrf.mxu0
  %v1011 = vadd.f32 %v787, %v1010
  %v1012 = vpop.f32.mrf.mxu0
  %1013 = vmatprep.mubr.f32.mxu0 %v679
  %1014 = vmatmul.mubr.f32.gmra.mxu0 %v678
  %v1015 = vpop.f32.mrf.mxu0
  %v1016 = vadd.f32 %v792, %v1015
  %v1017 = vpop.f32.mrf.mxu0
  %1018 = vmatprep.mubr.f32.mxu0 %v681
  %1019 = vmatmul.mubr.f32.gmra.mxu0 %v680
  %v1020 = vpop.f32.mrf.mxu0
  %v1021 = vadd.f32 %v797, %v1020
  %v1022 = vpop.f32.mrf.mxu0
  %1023 = vmatprep.mubr.f32.mxu0 %v683
  %1024 = vmatmul.mubr.f32.gmra.mxu0 %v682
  %v1025 = vpop.f32.mrf.mxu0
  %v1026 = vadd.f32 %v802, %v1025
  %v1027 = vpop.f32.mrf.mxu0
  %1028 = vmatprep.mubr.f32.mxu0 %v685
  %1029 = vmatmul.mubr.f32.gmra.mxu0 %v684
  %v1030 = vpop.f32.mrf.mxu0
  %v1031 = vadd.f32 %v807, %v1030
  %v1032 = vpop.f32.mrf.mxu0
  %1033 = vmatprep.mubr.f32.mxu0 %v687
  %1034 = vmatmul.mubr.f32.gmra.mxu0 %v686
  %v1035 = vpop.f32.mrf.mxu0
  %v1036 = vadd.f32 %v812, %v1035
  %v1037 = vpop.f32.mrf.mxu0
  %1038 = vmatprep.mubr.f32.mxu0 %v689
  %1039 = vmatmul.mubr.f32.gmra.mxu0 %v688
  %v1040 = vpop.f32.mrf.mxu0
  %v1041 = vadd.f32 %v817, %v1040
  %v1042 = vpop.f32.mrf.mxu0
  %1043 = vmatprep.mubr.f32.mxu0 %v691
  %1044 = vmatmul.mubr.f32.gmra.mxu0 %v690
  %v1045 = vpop.f32.mrf.mxu0
  %v1046 = vadd.f32 %v822, %v1045
  %v1047 = vpop.f32.mrf.mxu0
  %1048 = vmatprep.mubr.f32.mxu0 %v693
  %1049 = vmatmul.mubr.f32.gmra.mxu0 %v692
  %v1050 = vpop.f32.mrf.mxu0
  %v1051 = vadd.f32 %v827, %v1050
  %v1052 = vpop.f32.mrf.mxu0
  %1053 = vmatprep.mubr.f32.mxu0 %v695
  %1054 = vmatmul.mubr.f32.gmra.mxu0 %v694
  %v1055 = vpop.f32.mrf.mxu0
  %v1056 = vadd.f32 %v832, %v1055
  %v1057 = vpop.f32.mrf.mxu0
  %1058 = vmatprep.mubr.f32.mxu0 %v697
  %1059 = vmatmul.mubr.f32.gmra.mxu0 %v696
  %v1060 = vpop.f32.mrf.mxu0
  %v1061 = vadd.f32 %v837, %v1060
  %v1062 = vpop.f32.mrf.mxu0
  %1063 = vmatprep.mubr.f32.mxu0 %v699
  %1064 = vmatmul.mubr.f32.gmra.mxu0 %v698
  %v1065 = vpop.f32.mrf.mxu0
  %v1066 = vadd.f32 %v842, %v1065
  %v1067 = vpop.f32.mrf.mxu0
  %1068 = vmatprep.mubr.f32.mxu0 %v701
  %1069 = vmatmul.mubr.f32.gmra.mxu0 %v700
  %v1070 = vpop.f32.mrf.mxu0
  %v1071 = vadd.f32 %v847, %v1070
  %v1072 = vpop.f32.mrf.mxu0
  %1073 = vmatprep.mubr.f32.mxu0 %v703
  %1074 = vmatmul.mubr.f32.gmra.mxu0 %v702
  %v1075 = vpop.f32.mrf.mxu0
  %v1076 = vadd.f32 %v852, %v1075
  %v1077 = vpop.f32.mrf.mxu0
  %1078 = vmatprep.mubr.f32.mxu0 %v705
  %1079 = vmatmul.mubr.f32.gmra.mxu0 %v704
  %v1080 = vpop.f32.mrf.mxu0
  %v1081 = vadd.f32 %v857, %v1080
  %v1082 = vpop.f32.mrf.mxu0
  %1083 = vmatprep.mubr.f32.mxu0 %v707
  %1084 = vmatmul.mubr.f32.gmra.mxu0 %v706
  %v1085 = vpop.f32.mrf.mxu0
  %v1086 = vadd.f32 %v862, %v1085
  %v1087 = vpop.f32.mrf.mxu0
  %1088 = vmatprep.mubr.f32.mxu0 %v709
  %1089 = vmatmul.mubr.f32.gmra.mxu0 %v708
  %v1090 = vpop.f32.mrf.mxu0
  %v1091 = vadd.f32 %v867, %v1090
  %v1092 = vpop.f32.mrf.mxu0
  %1093 = vmatprep.mubr.f32.mxu0 %v711
  %1094 = vmatmul.mubr.f32.gmra.mxu0 %v710
  %v1095 = vpop.f32.mrf.mxu0
  %v1096 = vadd.f32 %v872, %v1095
  %v1097 = vpop.f32.mrf.mxu0
  %1098 = vmatprep.mubr.f32.mxu0 %v713
  %1099 = vmatmul.mubr.f32.gmra.mxu0 %v712
  %v1100 = vpop.f32.mrf.mxu0
  %v1101 = vadd.f32 %v877, %v1100
  %v1102 = vpop.f32.mrf.mxu0
  %1103 = vmatprep.mubr.f32.mxu0 %v715
  %1104 = vmatmul.mubr.f32.gmra.mxu0 %v714
  %v1105 = vpop.f32.mrf.mxu0
  %v1106 = vadd.f32 %v882, %v1105
  %v1107 = vpop.f32.mrf.mxu0
  %1108 = vmatprep.mubr.f32.mxu0 %v717
  %1109 = vmatmul.mubr.f32.gmra.mxu0 %v716
  %v1110 = vpop.f32.mrf.mxu0
  %v1111 = vadd.f32 %v887, %v1110
  %v1112 = vpop.f32.mrf.mxu0
  %1113 = vmatprep.mubr.f32.mxu0 %v719
  %1114 = vmatmul.mubr.f32.gmra.mxu0 %v718
  %v1115 = vpop.f32.mrf.mxu0
  %v1116 = vadd.f32 %v892, %v1115
  %v1117 = vpop.f32.mrf.mxu0
  %1118 = vmatprep.mubr.f32.mxu0 %v721
  %1119 = vmatmul.mubr.f32.gmra.mxu0 %v720
  %v1120 = vpop.f32.mrf.mxu0
  %v1121 = vadd.f32 %v897, %v1120
  %v1122 = vpop.f32.mrf.mxu0
  %1123 = vmatprep.mubr.f32.mxu0 %v723
  %1124 = vmatmul.mubr.f32.gmra.mxu0 %v722
  %v1125 = vpop.f32.mrf.mxu0
  %v1126 = vadd.f32 %v902, %v1125
  %v1127 = vpop.f32.mrf.mxu0
  %1128 = vmatprep.mubr.f32.mxu0 %v725
  %1129 = vmatmul.mubr.f32.gmra.mxu0 %v724
  %v1130 = vpop.f32.mrf.mxu0
  %v1131 = vadd.f32 %v907, %v1130
  %v1132 = vpop.f32.mrf.mxu0
  %1133 = vmatprep.mubr.f32.mxu0 %v727
  %1134 = vmatmul.mubr.f32.gmra.mxu0 %v726
  %v1135 = vpop.f32.mrf.mxu0
  %v1136 = vadd.f32 %v912, %v1135
  %v1137 = vpop.f32.mrf.mxu0
  %1138 = vmatprep.mubr.f32.mxu0 %v729
  %1139 = vmatmul.mubr.f32.gmra.mxu0 %v728
  %v1140 = vpop.f32.mrf.mxu0
  %v1141 = vadd.f32 %v917, %v1140
  %v1142 = vpop.f32.mrf.mxu0
  %1143 = vmatprep.mubr.f32.mxu0 %v731
  %1144 = vmatmul.mubr.f32.gmra.mxu0 %v730
  %v1145 = vpop.f32.mrf.mxu0
  %v1146 = vadd.f32 %v922, %v1145
  %v1147 = vpop.f32.mrf.mxu0
  %1148 = vdwg.mxu0
  %v1149 = vmax.f32 %v991, 0.0
  %v1150 = vmax.f32 %v996, 0.0
  %v1151 = vmax.f32 %v1001, 0.0
  %v1152 = vmax.f32 %v1006, 0.0
  %v1153 = vmax.f32 %v1011, 0.0
  %v1154 = vmax.f32 %v1016, 0.0
  %v1155 = vmax.f32 %v1021, 0.0
  %v1156 = vmax.f32 %v1026, 0.0
  %v1157 = vmax.f32 %v1031, 0.0
  %v1158 = vmax.f32 %v1036, 0.0
  %v1159 = vmax.f32 %v1041, 0.0
  %v1160 = vmax.f32 %v1046, 0.0
  %v1161 = vmax.f32 %v1051, 0.0
  %v1162 = vmax.f32 %v1056, 0.0
  %v1163 = vmax.f32 %v1061, 0.0
  %v1164 = vmax.f32 %v1066, 0.0
  %v1165 = vmax.f32 %v1071, 0.0
  %v1166 = vmax.f32 %v1076, 0.0
  %v1167 = vmax.f32 %v1081, 0.0
  %v1168 = vmax.f32 %v1086, 0.0
  %v1169 = vmax.f32 %v1091, 0.0
  %v1170 = vmax.f32 %v1096, 0.0
  %v1171 = vmax.f32 %v1101, 0.0
  %v1172 = vmax.f32 %v1106, 0.0
  %v1173 = vmax.f32 %v1111, 0.0
  %v1174 = vmax.f32 %v1116, 0.0
  %v1175 = vmax.f32 %v1121, 0.0
  %v1176 = vmax.f32 %v1126, 0.0
  %v1177 = vmax.f32 %v1131, 0.0
  %v1178 = vmax.f32 %v1136, 0.0
  %v1179 = vmax.f32 %v1141, 0.0
  %v1180 = vmax.f32 %v1146, 0.0
  %v1181 = vld [vmem:[%s5] sm:$0xff]
  %v1182 = vld [vmem:[%s5 + $0x8] sm:$0xff]
  %v1183 = vld [vmem:[%s6] sm:$0xff]
  %1185 = vset.pattern.permute.xlu0 0
  %1186 = vperm.xlu0 %1185, %v1183
  %v1187 = vpop.permute.xlu0 %1186
  %1189 = vmatprep.subr.mxu0 0.0
  %1190 = vmatpush1.msra.mxu0 %v1164
  %1191 = vmatprep.subr.mxu0 0.0
  %1192 = vmatpush1.msra.mxu0 %v1163
  %1193 = vmatprep.subr.mxu0 0.0
  %1194 = vmatpush1.msra.mxu0 %v1162
  %1195 = vmatprep.subr.mxu0 0.0
  %1196 = vmatpush1.msra.mxu0 %v1161
  %1197 = vmatprep.subr.mxu0 0.0
  %1198 = vmatpush1.msra.mxu0 %v1160
  %1199 = vmatprep.subr.mxu0 0.0
  %1200 = vmatpush1.msra.mxu0 %v1159
  %1201 = vmatprep.subr.mxu0 0.0
  %1202 = vmatpush1.msra.mxu0 %v1158
  %1203 = vmatprep.subr.mxu0 0.0
  %1204 = vmatpush1.msra.mxu0 %v1157
  %1205 = vmatprep.subr.mxu0 0.0
  %1206 = vmatpush1.msra.mxu0 %v1156
  %1207 = vmatprep.subr.mxu0 0.0
  %1208 = vmatpush1.msra.mxu0 %v1155
  %1209 = vmatprep.subr.mxu0 0.0
  %1210 = vmatpush1.msra.mxu0 %v1154
  %1211 = vmatprep.subr.mxu0 0.0
  %1212 = vmatpush1.msra.mxu0 %v1153
  %1213 = vmatprep.subr.mxu0 0.0
  %1214 = vmatpush1.msra.mxu0 %v1152
  %1215 = vmatprep.subr.mxu0 0.0
  %1216 = vmatpush1.msra.mxu0 %v1151
  %1217 = vmatprep.subr.mxu0 0.0
  %1218 = vmatpush1.msra.mxu0 %v1150
  %1219 = vmatprep.subr.mxu0 0.0
  %1220 = vmatpush1.msra.mxu0 %v1149
  %1221 = vmatprep.subr.mxu0 0.0
  %1222 = vmatpush2.msra.mxu0 %v1180
  %1223 = vmatprep.subr.mxu0 0.0
  %1224 = vmatpush2.msra.mxu0 %v1179
  %1225 = vmatprep.subr.mxu0 0.0
  %1226 = vmatpush2.msra.mxu0 %v1178
  %1227 = vmatprep.subr.mxu0 0.0
  %1228 = vmatpush2.msra.mxu0 %v1177
  %1229 = vmatprep.subr.mxu0 0.0
  %1230 = vmatpush2.msra.mxu0 %v1176
  %1231 = vmatprep.subr.mxu0 0.0
  %1232 = vmatpush2.msra.mxu0 %v1175
  %1233 = vmatprep.subr.mxu0 0.0
  %1234 = vmatpush2.msra.mxu0 %v1174
  %1235 = vmatprep.subr.mxu0 0.0
  %1236 = vmatpush2.msra.mxu0 %v1173
  %1237 = vmatprep.subr.mxu0 0.0
  %1238 = vmatpush2.msra.mxu0 %v1172
  %1239 = vmatprep.subr.mxu0 0.0
  %1240 = vmatpush2.msra.mxu0 %v1171
  %1241 = vmatprep.subr.mxu0 0.0
  %1242 = vmatpush2.msra.mxu0 %v1170
  %1243 = vmatprep.subr.mxu0 0.0
  %1244 = vmatpush2.msra.mxu0 %v1169
  %1245 = vmatprep.subr.mxu0 0.0
  %1246 = vmatpush2.msra.mxu0 %v1168
  %1247 = vmatprep.subr.mxu0 0.0
  %1248 = vmatpush2.msra.mxu0 %v1167
  %1249 = vmatprep.subr.mxu0 0.0
  %1250 = vmatpush2.msra.mxu0 %v1166
  %1251 = vmatprep.subr.mxu0 0.0
  %1252 = vmatpush2.msra.mxu0 %v1165
  %1253 = vmatprep.mubr.f32.mxu0 %v1182
  %1254 = vmatmul.mubr.f32.gmra.mxu0 %v1181
  %v1255 = vpop.f32.mrf.mxu0
  %v1256 = vadd.f32 %v1187, %v1255
  %v1257 = vpop.f32.mrf.mxu0
  %1258 = vdwg.mxu0
  %1259 = vst [vmem:[%s7] sm:$0xff] %v1256
  // Predicated region
  $region30: #{dqn_forward.1} parent=0 // pred_check
    _
  $region31: #{dqn_forward.1} parent=0 // pred_check_branch
    %1261 = sbr.rel (0) target = $region33
  $region32: #{dqn_forward.1} parent=0 // pred_region
    _
  $region33: #{dqn_forward.1} parent=0 // pred_fallthru
    _
  // Predicated region
  $region34: #{dqn_forward.1} parent=0 // pred_check
    _
  $region35: #{dqn_forward.1} parent=0 // pred_check_branch
    %1263 = sbr.rel (0) target = $region37
  $region36: #{dqn_forward.1} parent=0 // pred_region
    _
  $region37: #{dqn_forward.1} parent=0 // pred_fallthru
    _

</llo_original>
